<compile_context>
chip_gen: v6e
topology: v6e:2x2x1
jax: 0.10.0
libtpu: 0.0.40
codegen_flags: <defaults>
</compile_context>

<pallas_src>
import math

import jax
import jax.numpy as jnp
from jax.experimental import pallas as pl
from jax.experimental.pallas import tpu as pltpu


def _round_up(n, m):
    return ((n + m - 1) // m) * m


def _cdiv(a, b):
    return -(-a // b)


def _choose_n_tile(out_half):
    # Keep full width when small or not 128-aligned (the block must then equal
    # the full dim). Otherwise tile N to a 128-multiple divisor <= 512 so the
    # weight slab / output tile stay VMEM-friendly and MXU-aligned.
    if out_half <= 512 or out_half % 128 != 0:
        return out_half
    for tn in (512, 384, 256, 128):
        if out_half % tn == 0:
            return tn
    return out_half


def _choose_row_tiling(n_rows, sublane, row_cap):
    # Pick the number of row blocks first, then the smallest sublane-aligned
    # tm that covers them -> minimal tail padding (review item on pad waste).
    row_cap = max(sublane, (row_cap // sublane) * sublane)
    n_blocks = _cdiv(n_rows, row_cap)
    tm = _round_up(max(_cdiv(n_rows, n_blocks), 1), sublane)
    return tm, n_blocks, tm * n_blocks


def _partitioned_linear_kernel(x_ref, w_ref, b_ref, o_ref):
    # x: (tm, in_half), w: (in_half, tn) -> canonical [M,K]x[K,N] MXU matmul.
    # The weight was pre-transposed once in the wrapper, so there is no
    # in-kernel relayout/transpose of the weight tile.
    acc = jnp.dot(x_ref[...], w_ref[...], preferred_element_type=jnp.float32)
    # Bias is (1, tn); the VPU add hides under MXU/store slack.
    o_ref[...] = (acc + b_ref[...].astype(jnp.float32)).astype(o_ref.dtype)


def prepare_partitioned_linear_params(w_c, b_c, w_p, b_p):
    """Build the kernel's weight/bias operands ONCE (cache & reuse across calls).

    w_c, w_p: [out_half, in_half] (PyTorch nn.Linear layout)
    b_c, b_p: [out_half]
    Returns (w_stack [2, in_half, out_half]  (MXU-native K,N layout),
             b_stack [2, 1, out_half]).
    """
    w_c = jnp.asarray(w_c)
    w_p = jnp.asarray(w_p)
    b_c = jnp.asarray(b_c)
    b_p = jnp.asarray(b_p)
    if w_c.ndim != 2 or w_c.shape != w_p.shape:
        raise ValueError(f"w_c/w_p must be equal-shape 2-D, got {w_c.shape} vs {w_p.shape}")
    out_half = w_c.shape[0]
    if b_c.shape != (out_half,) or b_p.shape != (out_half,):
        raise ValueError("bias shapes must be (out_half,)")
    w_stack = jnp.stack([w_c.T, w_p.T])            # [2, in_half, out_half]
    b_stack = jnp.stack([b_c, b_p])[:, None, :]    # [2, 1, out_half]
    return w_stack, b_stack


def partitioned_linear_prepared(x, params, *, block_rows=512):
    """PartitionedLinear.forward with pre-prepared (cached) params.

    x: [..., 2*in_half] or a tuple (x_c, x_p) of [..., in_half]
    params: output of prepare_partitioned_linear_params
    Returns (out_c, out_p), each [..., out_half].
    """
    w_stack, b_stack = params
    _, in_half, out_half = w_stack.shape

    # ---- assemble x as [2, n_rows, in_half] (partition-major) --------------
    if isinstance(x, tuple):
        x_c, x_p = x
        if x_c.shape != x_p.shape or x_c.shape[-1] != in_half:
            raise ValueError(
                f"tuple halves must be equal-shape with last dim {in_half}, "
                f"got {x_c.shape} / {x_p.shape}")
        lead_shape = x_c.shape[:-1]
        n_rows = int(math.prod(lead_shape)) if lead_shape else 1
        x_stack = jnp.stack([x_c.reshape(n_rows, in_half),
                             x_p.reshape(n_rows, in_half)])
    else:
        if x.shape[-1] != 2 * in_half:
            raise ValueError(
                f"x last dim must be {2 * in_half}, got {x.shape[-1]}")
        lead_shape = x.shape[:-1]
        n_rows = int(math.prod(lead_shape)) if lead_shape else 1
        x2 = x.reshape(n_rows, 2 * in_half)
        x_stack = jnp.stack([x2[:, :in_half], x2[:, in_half:]])

    dtype = x_stack.dtype
    itemsize = jnp.dtype(dtype).itemsize
    sublane = {4: 8, 2: 16, 1: 32}.get(itemsize, 8)   # f32 / bf16 / int8 packing

    # ---- N tiling -----------------------------------------------------------
    tn = _choose_n_tile(out_half)
    n_n_blocks = out_half // tn

    # Weight is grid-invariant within a partition when n_n_blocks == 1 (it is
    # re-DMA'd only at the partition boundary); single-buffer it when large to
    # halve its VMEM footprint (matters on v7x's 64 MiB VMEM).
    w_block_bytes = in_half * tn * itemsize
    single_buffer_weight = (n_n_blocks == 1) and (w_block_bytes >= (1 << 20))
    w_bufs = 1 if single_buffer_weight else 2

    # ---- VMEM-budget-aware row tiling (safe for v5e's 16 MiB default) -------
    vmem_budget = 12 << 20
    fixed_bytes = w_bufs * w_block_bytes + 2 * tn * itemsize          # weight + bias bufs
    per_row_bytes = (2 * in_half + 2 * tn) * itemsize + 4 * tn        # x/out dbl-buf + f32 acc
    row_cap = max(sublane, max(vmem_budget - fixed_bytes, 0) // max(per_row_bytes, 1))
    row_cap = min(block_rows, row_cap)

    tm, n_row_blocks, padded_rows = _choose_row_tiling(n_rows, sublane, row_cap)
    if padded_rows != n_rows:
        x_stack = jnp.pad(x_stack, ((0, 0), (0, padded_rows - n_rows), (0, 0)))

    needed_vmem = fixed_bytes + per_row_bytes * tm

    # ---- specs --------------------------------------------------------------
    x_spec = pl.BlockSpec((None, tm, in_half), lambda p, j, i: (p, i, 0))
    if single_buffer_weight:
        w_spec = pl.BlockSpec((None, in_half, tn), lambda p, j, i: (p, 0, j),
                              pipeline_mode=pl.Buffered(1))
    else:
        w_spec = pl.BlockSpec((None, in_half, tn), lambda p, j, i: (p, 0, j))
    b_spec = pl.BlockSpec((None, 1, tn), lambda p, j, i: (p, 0, j))
    o_spec = pl.BlockSpec((None, tm, tn), lambda p, j, i: (p, i, j))

    # grid = (partition, N tile, row block): rows innermost keeps the weight
    # block index constant across the inner loop (weight-stationary).
    grid = (2, n_n_blocks, n_row_blocks)

    cp_kwargs = dict(dimension_semantics=("parallel", "parallel", "parallel"))
    if needed_vmem > (16 << 20):
        cp_kwargs["vmem_limit_bytes"] = min(int(needed_vmem) + (4 << 20), 64 << 20)
    compiler_params = pltpu.CompilerParams(**cp_kwargs)

    # Actual MXU work == useful work (no zero-padding of the contraction).
    cost = pl.CostEstimate(
        flops=4 * n_rows * in_half * out_half,
        bytes_accessed=(n_n_blocks * x_stack.size + w_stack.size + b_stack.size
                        + 2 * padded_rows * out_half) * itemsize,
        transcendentals=0,
    )

    out = pl.pallas_call(
        _partitioned_linear_kernel,
        out_shape=jax.ShapeDtypeStruct((2, padded_rows, out_half), dtype),
        grid_spec=pltpu.PrefetchScalarGridSpec(
            num_scalar_prefetch=0,
            grid=grid,
            in_specs=[x_spec, w_spec, b_spec],
            out_specs=o_spec,
        ),
        compiler_params=compiler_params,
        cost_estimate=cost,
    )(x_stack, w_stack, b_stack)

    out_c = out[0, :n_rows].reshape(*lead_shape, out_half)
    out_p = out[1, :n_rows].reshape(*lead_shape, out_half)
    return out_c, out_p


def partitioned_linear(x, w_c, b_c, w_p, b_p, *, block_rows=512):
    """Convenience wrapper: prepares params on every call.

    For repeated forward passes, call prepare_partitioned_linear_params once
    at init and use partitioned_linear_prepared (avoids re-materializing the
    stacked/transposed weights each call).
    """
    params = prepare_partitioned_linear_params(w_c, b_c, w_p, b_p)
    return partitioned_linear_prepared(x, params, block_rows=block_rows)


if __name__ == "__main__":
    # Module config: in_features=32, out_features=32 -> halves of 16.
    batch, seq, in_features, out_features = 2, 8, 32, 32
    in_half, out_half = in_features // 2, out_features // 2

    key = jax.random.PRNGKey(0)
    kx, kwc, kbc, kwp, kbp = jax.random.split(key, 5)

    x = jax.random.normal(kx, (batch, seq, in_features), dtype=jnp.float32)

    # Deterministic PyTorch-style init: U(-1/sqrt(in_half), 1/sqrt(in_half)).
    bound = 1.0 / (in_half ** 0.5)
    w_c = jax.random.uniform(kwc, (out_half, in_half), jnp.float32, -bound, bound)
    b_c = jax.random.uniform(kbc, (out_half,), jnp.float32, -bound, bound)
    w_p = jax.random.uniform(kwp, (out_half, in_half), jnp.float32, -bound, bound)
    b_p = jax.random.uniform(kbp, (out_half,), jnp.float32, -bound, bound)

    # Prepare (transpose + stack) the weights ONCE; reuse across calls.
    params = prepare_partitioned_linear_params(w_c, b_c, w_p, b_p)

    out_c, out_p = partitioned_linear_prepared(x, params)
    jax.block_until_ready((out_c, out_p))

    # Reference (same semantics as the PyTorch forward).
    x_c_ref, x_p_ref = jnp.split(x, 2, axis=-1)
    ref_c = x_c_ref @ w_c.T + b_c
    ref_p = x_p_ref @ w_p.T + b_p
    assert out_c.shape == (batch, seq, out_half)
    assert out_p.shape == (batch, seq, out_half)
    assert jnp.allclose(out_c, ref_c, atol=1e-5, rtol=1e-5)
    assert jnp.allclose(out_p, ref_p, atol=1e-5, rtol=1e-5)

    # Tuple-input path + convenience (un-prepared) wrapper.
    out_c2, out_p2 = partitioned_linear((x_c_ref, x_p_ref), w_c, b_c, w_p, b_p)
    jax.block_until_ready((out_c2, out_p2))
    assert jnp.allclose(out_c2, ref_c, atol=1e-5, rtol=1e-5)
    assert jnp.allclose(out_p2, ref_p, atol=1e-5, rtol=1e-5)

    # Larger row count: exercises multi-row-block grid + tail-row padding.
    b2, s2 = 4, 203                      # 812 rows -> 2 row blocks, tm=408, 4 pad rows
    x_big = jax.random.normal(jax.random.PRNGKey(1), (b2, s2, in_features), jnp.float32)
    oc_big, op_big = partitioned_linear_prepared(x_big, params)
    jax.block_until_ready((oc_big, op_big))
    xc_big, xp_big = jnp.split(x_big, 2, axis=-1)
    assert jnp.allclose(oc_big, xc_big @ w_c.T + b_c, atol=1e-5, rtol=1e-5)
    assert jnp.allclose(op_big, xp_big @ w_p.T + b_p, atol=1e-5, rtol=1e-5)

    print("KERNEL_OK")
</pallas_src>

<mosaic_0001>
module attributes {stable_mosaic.version = 11 : i64} {
  func.func @_partitioned_linear_kernel(%arg0: i32, %arg1: i32, %arg2: i32, %arg3: memref<1x16x16xf32, #tpu.memory_space<vmem>>, %arg4: memref<1x16x16xf32, #tpu.memory_space<vmem>>, %arg5: memref<1x1x16xf32, #tpu.memory_space<vmem>>, %arg6: memref<1x16x16xf32, #tpu.memory_space<vmem>>) attributes {dimension_semantics = [#tpu.dimension_semantics<parallel>, #tpu.dimension_semantics<parallel>, #tpu.dimension_semantics<parallel>], iteration_bounds = array<i64: 2, 1, 1>, scalar_prefetch = 0 : i64, scratch_operands = 0 : i64, tpu.core_type = #tpu.core_type<tc>, window_params = [{transform_indices = @transform_0, window_bounds = array<i64: 1, 16, 16>}, {transform_indices = @transform_1, window_bounds = array<i64: 1, 16, 16>}, {transform_indices = @transform_2, window_bounds = array<i64: 1, 1, 16>}, {transform_indices = @transform_3, window_bounds = array<i64: 1, 16, 16>}]} {
    %c0 = arith.constant 0 : index
    %c0_0 = arith.constant 0 : index
    %c0_1 = arith.constant 0 : index
    %0 = vector.load %arg3[%c0, %c0_0, %c0_1] : memref<1x16x16xf32, #tpu.memory_space<vmem>>, vector<1x16x16xf32>
    %1 = vector.shape_cast %0 : vector<1x16x16xf32> to vector<16x16xf32>
    %c0_2 = arith.constant 0 : index
    %c0_3 = arith.constant 0 : index
    %c0_4 = arith.constant 0 : index
    %2 = vector.load %arg4[%c0_2, %c0_3, %c0_4] : memref<1x16x16xf32, #tpu.memory_space<vmem>>, vector<1x16x16xf32>
    %3 = vector.shape_cast %2 : vector<1x16x16xf32> to vector<16x16xf32>
    %cst = arith.constant dense<0.000000e+00> : vector<16x16xf32>
    %4 = tpu.matmul %1, %3, %cst {dimension_numbers = #tpu.dot_dimension_numbers<[1], [0], [0], [1], [0, 0, 1, 1], [], []>} : vector<16x16xf32>, vector<16x16xf32>, vector<16x16xf32> -> vector<16x16xf32>
    %c0_5 = arith.constant 0 : index
    %c0_6 = arith.constant 0 : index
    %c0_7 = arith.constant 0 : index
    %5 = vector.load %arg5[%c0_5, %c0_6, %c0_7] : memref<1x1x16xf32, #tpu.memory_space<vmem>>, vector<1x1x16xf32>
    %6 = vector.shape_cast %5 : vector<1x1x16xf32> to vector<1x16xf32>
    %7 = vector.broadcast %6 : vector<1x16xf32> to vector<16x16xf32>
    %8 = arith.addf %4, %7 : vector<16x16xf32>
    %c0_8 = arith.constant 0 : index
    %c0_9 = arith.constant 0 : index
    %c0_10 = arith.constant 0 : index
    %9 = vector.load %arg6[%c0_8, %c0_9, %c0_10] : memref<1x16x16xf32, #tpu.memory_space<vmem>>, vector<1x16x16xf32>
    %10 = vector.shape_cast %9 : vector<1x16x16xf32> to vector<16x16xf32>
    %11 = vector.shape_cast %8 : vector<16x16xf32> to vector<1x16x16xf32>
    tpu.vector_store %arg6[%c0_8, %c0_9, %c0_10], %11 {strides = array<i32>} : memref<1x16x16xf32, #tpu.memory_space<vmem>>, vector<1x16x16xf32>,
    return
  }
  func.func @transform_0(%arg0: i32, %arg1: i32, %arg2: i32) -> (i32, i32, i32) {
    %c0_i32 = arith.constant 0 : i32
    %c0_i32_0 = arith.constant 0 : i32
    return %arg0, %arg2, %c0_i32 : i32, i32, i32
  }
  func.func @transform_1(%arg0: i32, %arg1: i32, %arg2: i32) -> (i32, i32, i32) {
    %c0_i32 = arith.constant 0 : i32
    %c0_i32_0 = arith.constant 0 : i32
    return %arg0, %c0_i32, %arg1 : i32, i32, i32
  }
  func.func @transform_2(%arg0: i32, %arg1: i32, %arg2: i32) -> (i32, i32, i32) {
    %c0_i32 = arith.constant 0 : i32
    %c0_i32_0 = arith.constant 0 : i32
    return %arg0, %c0_i32, %arg1 : i32, i32, i32
  }
  func.func @transform_3(%arg0: i32, %arg1: i32, %arg2: i32) -> (i32, i32, i32) {
    %c0_i32 = arith.constant 0 : i32
    return %arg0, %arg2, %arg1 : i32, i32, i32
  }
}

</mosaic_0001>

<llo_original>
// kernel: tpu_custom_call.1
$region0: #{tpu_custom_call.1}
  #allocation0 [shape = 'u32[]', space=smem, size = 0x4, offset = 0x4, fixed_abs, tag = 'smem constant byte address 0x4 - core index']
  #allocation1 [shape = 'u32[144,128]{1,0:T(1,128)}', space=vmem, size = 0x12000, scoped, tag = 'internal scratch']
  %s0 = inlined_call_operand.hbm [shape: f32[2,16,16], index: 0, kind: input, shape index: {}]
  %s1 = inlined_call_operand.hbm [shape: f32[2,16,16], index: 1, kind: input, shape index: {}]
  %s2 = inlined_call_operand.vmem [shape: f32[2,1,16], index: 2, kind: input, shape index: {}]
  %s3 = inlined_call_operand.hbm [shape: f32[2,16,16], index: 3, kind: output, shape index: {}]
  %s4 = sld [smem:[#allocation0]]
  $region53: #{tpu_custom_call.1} parent=0
    _
  %s6 = ssub.s32 1, %s4
  %s7 = scalar_select 0, %s6, %s4
  $region1: #{tpu_custom_call.1} parent=0
    #allocation2 [shape = 'u8[16384]{0}', space=vmem, size = 0x4000, scoped, tag = 'input window, operand 0']
    #allocation3 [shape = 's32[2]{0}', space=sflag, size = 0x8, scoped, tag = 'scoped memory for tpu_custom_call.1']
    #allocation4 [shape = 's32[2]{0}', space=sflag, size = 0x8, scoped, tag = 'scoped memory for tpu_custom_call.1']
    #allocation5 [shape = 'u8[16384]{0}', space=vmem, size = 0x4000, scoped, tag = 'input window, operand 1']
    #allocation6 [shape = 's32[2]{0}', space=sflag, size = 0x8, scoped, tag = 'scoped memory for tpu_custom_call.1']
    #allocation7 [shape = 'u8[16384]{0}', space=vmem, size = 0x4000, scoped, tag = 'output window, operand 0']
    %8 = vsyncpa [#allocation3], 0
    %s9 = scalar_lea.sflag [#allocation3], 1
    %10 = vsyncpa %s9, 0
    %11 = vsyncpa [#allocation6], 0
    %s12 = scalar_lea.sflag [#allocation6], 1
    %13 = vsyncpa %s12, 0
    %14 = vsyncpa [#allocation4], 0
    %s15 = scalar_lea.sflag [#allocation4], 1
    %16 = vsyncpa %s15, 0
    loop: start=0, step=1, limit=4
    $region2: #{tpu_custom_call.1} parent=1 // loop_pre_header
      _
    $region3: #{tpu_custom_call.1} parent=1 // loop_header
      %s18 = sphi 0, %s22
      %p19 = scmp.ge.s32.totalorder %s18, 4
      %s25 = sphi 0, %s44
      %s26 = sphi 0, %s40
      %s27 = sphi 0, %s36
      %s28 = sphi 0, %s25
      %s29 = sphi 0, %s26
      %s30 = sphi 0, %s27
      %s31 = sphi 0, %s28
      %s32 = sphi 0, %s29
      %s33 = sphi 0, %s30
      %s49 = sphi 0, %s51
      %s52 = sphi 0, %s49
      %s53 = sphi 0, %s52
      %s69 = sphi 0, %s53
      %s77 = sphi 0, %s79
      %s80 = sphi 0, %s77
      %s81 = sphi 0, %s80
      %s97 = sphi 0, %s81
      %s105 = sphi 0, %s107
      %s108 = sphi 0, %s105
      %s109 = sphi 0, %s108
      %s125 = sphi 0, %s109
      %s135 = sphi 0, %s137
      %s138 = sphi 0, %s135
      %s139 = sphi 0, %s138
      %s155 = sphi 0, %s139
    $region4: #{tpu_custom_call.1} parent=1 // loop_header_branch
      %21 = sbr.rel (%p19) target = $region8
    $region5: #{tpu_custom_call.1} parent=1 // loop_body
      %s23 = ssub.s32 %s18, 1
      %s24 = ssub.s32 %s18, 2
      %s34 = sadd.s32 1, %s27
      %p35 = scmp.ge.s32.totalorder %s34, 1
      %s36 = scalar_select %p35, 0, %s34
      %s37 = sadd.s32 1, %s26
      %s38 = scalar_select %p35, %s37, %s26
      %p39 = scmp.ge.s32.totalorder %s38, 1
      %s40 = scalar_select %p39, 0, %s38
      %s41 = sadd.s32 1, %s25
      %s42 = scalar_select %p39, %s41, %s25
      %p43 = scmp.ge.s32.totalorder %s42, 2
      %s44 = scalar_select %p43, 0, %s42
      %s45 = ssub.s32 %s25, %s44
      %s46 = ssub.s32 %s27, %s36
      %s47 = sor.u32 %s45, %s46
      %p48 = scmp.eq.s32.totalorder %s47, 0
      %s50 = sadd.s32 %s49, 1
      %s51 = scalar_select %p48, %s49, %s50
      %p54 = pneg %p48
      %p55 = scmp.eq.s32.totalorder %s18, 1
      %p56 = por %p54, %p55
      %p57 = scmp.ne.s32.totalorder %s49, %s52
      %p58 = scmp.eq.s32.totalorder %s18, 0
      %p59 = por %p57, %p58
      %p60 = scmp.ne.s32.totalorder %s49, %s52
      %p61 = scmp.eq.s32.totalorder %s23, 1
      %p62 = por %p60, %p61
      %p63 = scmp.ne.s32.totalorder %s52, %s53
      %p64 = scmp.eq.s32.totalorder %s23, 0
      %p65 = por %p63, %p64
      %p66 = scmp.ne.s32.totalorder %s52, %s53
      %p67 = scmp.eq.s32.totalorder %s24, 1
      %p68 = por %p66, %p67
      %p70 = scmp.ne.s32.totalorder %s53, %s69
      %p71 = scmp.eq.s32.totalorder %s24, 0
      %p72 = por %p70, %p71
      %s73 = ssub.s32 %s25, %s44
      %s74 = ssub.s32 %s26, %s40
      %s75 = sor.u32 %s73, %s74
      %p76 = scmp.eq.s32.totalorder %s75, 0
      %s78 = sadd.s32 %s77, 1
      %s79 = scalar_select %p76, %s77, %s78
      %p82 = pneg %p76
      %p83 = scmp.eq.s32.totalorder %s18, 1
      %p84 = por %p82, %p83
      %p85 = scmp.ne.s32.totalorder %s77, %s80
      %p86 = scmp.eq.s32.totalorder %s18, 0
      %p87 = por %p85, %p86
      %p88 = scmp.ne.s32.totalorder %s77, %s80
      %p89 = scmp.eq.s32.totalorder %s23, 1
      %p90 = por %p88, %p89
      %p91 = scmp.ne.s32.totalorder %s80, %s81
      %p92 = scmp.eq.s32.totalorder %s23, 0
      %p93 = por %p91, %p92
      %p94 = scmp.ne.s32.totalorder %s80, %s81
      %p95 = scmp.eq.s32.totalorder %s24, 1
      %p96 = por %p94, %p95
      %p98 = scmp.ne.s32.totalorder %s81, %s97
      %p99 = scmp.eq.s32.totalorder %s24, 0
      %p100 = por %p98, %p99
      %s101 = ssub.s32 %s25, %s44
      %s102 = ssub.s32 %s26, %s40
      %s103 = sor.u32 %s101, %s102
      %p104 = scmp.eq.s32.totalorder %s103, 0
      %s106 = sadd.s32 %s105, 1
      %s107 = scalar_select %p104, %s105, %s106
      %p110 = pneg %p104
      %p111 = scmp.eq.s32.totalorder %s18, 1
      %p112 = por %p110, %p111
      %p113 = scmp.ne.s32.totalorder %s105, %s108
      %p114 = scmp.eq.s32.totalorder %s18, 0
      %p115 = por %p113, %p114
      %p116 = scmp.ne.s32.totalorder %s105, %s108
      %p117 = scmp.eq.s32.totalorder %s23, 1
      %p118 = por %p116, %p117
      %p119 = scmp.ne.s32.totalorder %s108, %s109
      %p120 = scmp.eq.s32.totalorder %s23, 0
      %p121 = por %p119, %p120
      %p122 = scmp.ne.s32.totalorder %s108, %s109
      %p123 = scmp.eq.s32.totalorder %s24, 1
      %p124 = por %p122, %p123
      %p126 = scmp.ne.s32.totalorder %s109, %s125
      %p127 = scmp.eq.s32.totalorder %s24, 0
      %p128 = por %p126, %p127
      %s129 = ssub.s32 %s25, %s44
      %s130 = ssub.s32 %s27, %s36
      %s131 = sor.u32 %s129, %s130
      %s132 = ssub.s32 %s26, %s40
      %s133 = sor.u32 %s131, %s132
      %p134 = scmp.eq.s32.totalorder %s133, 0
      %s136 = sadd.s32 %s135, 1
      %s137 = scalar_select %p134, %s135, %s136
      %p140 = pneg %p134
      %p141 = scmp.eq.s32.totalorder %s18, 1
      %p142 = por %p140, %p141
      %p143 = scmp.ne.s32.totalorder %s135, %s138
      %p144 = scmp.eq.s32.totalorder %s18, 0
      %p145 = por %p143, %p144
      %p146 = scmp.ne.s32.totalorder %s135, %s138
      %p147 = scmp.eq.s32.totalorder %s23, 1
      %p148 = por %p146, %p147
      %p149 = scmp.ne.s32.totalorder %s138, %s139
      %p150 = scmp.eq.s32.totalorder %s23, 0
      %p151 = por %p149, %p150
      %p152 = scmp.ne.s32.totalorder %s138, %s139
      %p153 = scmp.eq.s32.totalorder %s24, 1
      %p154 = por %p152, %p153
      %p156 = scmp.ne.s32.totalorder %s139, %s155
      %p157 = scmp.eq.s32.totalorder %s24, 0
      %p158 = por %p156, %p157
      %p159 = scmp.le.s32.totalorder 1, %s18
      %p160 = scmp.lt.s32.totalorder %s18, 3
      %p161 = pnand %p159, %p160
      %p162 = pneg %p161
      // Predicated region
      $region9: #{tpu_custom_call.1} parent=5 // pred_check
        _
      $region10: #{tpu_custom_call.1} parent=5 // pred_check_branch
        %164 = sbr.rel (%p161) target = $region12
      $region11: #{tpu_custom_call.1} parent=5 // pred_region
        %s165 = ssub.s32 %s18, 1
      $region12: #{tpu_custom_call.1} parent=5 // pred_fallthru
        _
      %p166 = scmp.lt.s32.totalorder %s18, 2
      // Predicated region
      $region13: #{tpu_custom_call.1} parent=5 // pred_check
        %p167 = pneg %p166
      $region14: #{tpu_custom_call.1} parent=5 // pred_check_branch
        %169 = sbr.rel (%p167) target = $region16
      $region15: #{tpu_custom_call.1} parent=5 // pred_region
        // Predicated region
        $region17: #{tpu_custom_call.1} parent=15 // pred_check
          %p170 = pneg %p59
        $region18: #{tpu_custom_call.1} parent=15 // pred_check_branch
          %172 = sbr.rel (%p170) target = $region20
        $region19: #{tpu_custom_call.1} parent=15 // pred_region
          %s173 = sand.u32 %s49, 1
          %s174 = scalar_lea.sflag [#allocation3], %s173
          %s175 = sand.u32 %s49, 1
          %s176 = smul.addr %s175, 16
          %s177 = scalar_lea.vmem [#allocation2], %s176
          %s178 = smul.u32 2, %s27
          %s180 = ssub.s32 256, 256
          %181 = vsyncadd %s174, %s180
          %s182 = smul.addr %s25, 2
          %s183 = sadd.s32 %s178, %s182
          %s184 = smul.addr %s183, 128
          %s185 = scalar_lea.hbm %s0, %s184
          %s186 = sshll.u32 %s177, 4
          %s187 = int_to_ptr.vmem [resolvable:$true] %s186
          %192 = dma.hbm_to_vmem [thread:$0]  %s185, 256, %s187, %s174, 128, 128, 8
        $region20: #{tpu_custom_call.1} parent=15 // pred_fallthru
          _
        // Predicated region
        $region21: #{tpu_custom_call.1} parent=15 // pred_check
          %p193 = pneg %p87
        $region22: #{tpu_custom_call.1} parent=15 // pred_check_branch
          %195 = sbr.rel (%p193) target = $region24
        $region23: #{tpu_custom_call.1} parent=15 // pred_region
          %s196 = sand.u32 %s77, 1
          %s197 = scalar_lea.sflag [#allocation6], %s196
          %s198 = sand.u32 %s77, 1
          %s199 = smul.addr %s198, 16
          %s200 = scalar_lea.vmem [#allocation5], %s199
          %s202 = ssub.s32 256, 256
          %203 = vsyncadd %s197, %s202
          %s204 = smul.addr %s25, 2
          %s205 = sadd.s32 %s26, %s204
          %s206 = smul.addr %s205, 128
          %s207 = scalar_lea.hbm %s1, %s206
          %s208 = sshll.u32 %s200, 4
          %s209 = int_to_ptr.vmem [resolvable:$true] %s208
          %214 = dma.hbm_to_vmem [thread:$0]  %s207, 256, %s209, %s197, 128, 128, 8
        $region24: #{tpu_custom_call.1} parent=15 // pred_fallthru
          _
        // Predicated region
        $region25: #{tpu_custom_call.1} parent=15 // pred_check
          %p215 = pneg %p115
        $region26: #{tpu_custom_call.1} parent=15 // pred_check_branch
          %217 = sbr.rel (%p215) target = $region28
        $region27: #{tpu_custom_call.1} parent=15 // pred_region
          %p218 = scmp.lt.s32.totalorder %s25, 1
          %s219 = scalar_select %p218, %s25, 1
          %p220 = scmp.lt.s32.totalorder %s26, 0
          %s221 = scalar_select %p220, %s26, 0
          %s222 = sadd.s32 %s221, %s219
          %s223 = scalar_lea.vmem %s2, %s222
        $region28: #{tpu_custom_call.1} parent=15 // pred_fallthru
          _
      $region16: #{tpu_custom_call.1} parent=5 // pred_fallthru
        _
      %p224 = scmp.le.s32.totalorder 1, %s18
      %p225 = scmp.lt.s32.totalorder %s18, 3
      %p226 = pnand %p224, %p225
      %p227 = pneg %p226
      // Predicated region
      $region29: #{tpu_custom_call.1} parent=5 // pred_check
        _
      $region30: #{tpu_custom_call.1} parent=5 // pred_check_branch
        %229 = sbr.rel (%p226) target = $region32
      $region31: #{tpu_custom_call.1} parent=5 // pred_region
        %s230 = ssub.s32 %s18, 1
        %s231 = sand.u32 %s52, 1
        %s232 = scalar_lea.sflag [#allocation3], %s231
        %s233 = sand.u32 %s52, 1
        %s234 = smul.addr %s233, 16
        %s235 = scalar_lea.vmem [#allocation2], %s234
        // Predicated region
        $region33: #{tpu_custom_call.1} parent=31 // pred_check
          %p236 = pneg %p65
        $region34: #{tpu_custom_call.1} parent=31 // pred_check_branch
          %238 = sbr.rel (%p236) target = $region36
        $region35: #{tpu_custom_call.1} parent=31 // pred_region
          %239 = dma.done %s232, 256
        $region36: #{tpu_custom_call.1} parent=31 // pred_fallthru
          _
        %s240 = sand.u32 %s80, 1
        %s241 = scalar_lea.sflag [#allocation6], %s240
        %s242 = sand.u32 %s80, 1
        %s243 = smul.addr %s242, 16
        %s244 = scalar_lea.vmem [#allocation5], %s243
        // Predicated region
        $region37: #{tpu_custom_call.1} parent=31 // pred_check
          %p245 = pneg %p93
        $region38: #{tpu_custom_call.1} parent=31 // pred_check_branch
          %247 = sbr.rel (%p245) target = $region40
        $region39: #{tpu_custom_call.1} parent=31 // pred_region
          %248 = dma.done %s241, 256
        $region40: #{tpu_custom_call.1} parent=31 // pred_fallthru
          _
        %s249 = sand.u32 %s52, 1
        %s250 = scalar_lea.sflag [#allocation3], %s249
        %s251 = sand.u32 %s52, 1
        %s252 = smul.addr %s251, 16
        %s253 = scalar_lea.vmem [#allocation2], %s252
        %p254 = pneg %p65
        %p255 = pneg %p62
        %s256 = sand.u32 %s80, 1
        %s257 = scalar_lea.sflag [#allocation6], %s256
        %s258 = sand.u32 %s80, 1
        %s259 = smul.addr %s258, 16
        %s260 = scalar_lea.vmem [#allocation5], %s259
        %p261 = pneg %p93
        %p262 = pneg %p90
        %p263 = scmp.lt.s32.totalorder %s28, 1
        %s264 = scalar_select %p263, %s28, 1
        %p265 = scmp.lt.s32.totalorder %s29, 0
        %s266 = scalar_select %p265, %s29, 0
        %s267 = sadd.s32 %s266, %s264
        %s268 = scalar_lea.vmem %s2, %s267
        %p269 = pneg %p121
        %p270 = pneg %p118
        %p271 = pneg %p151
        %p272 = pneg %p148
        %s273 = sand.u32 %s138, 1
        %s274 = scalar_lea.sflag [#allocation4], %s273
        %s275 = sand.u32 %s138, 1
        %s276 = smul.addr %s275, 16
        %s277 = scalar_lea.vmem [#allocation7], %s276
        %s278 = smul.u32 2, %s30
        %p279 = scmp.lt.s32.totalorder %s28, 1
        %s280 = scalar_select %p279, %s28, 1
        %p281 = scmp.lt.s32.totalorder %s29, 0
        %s282 = scalar_select %p281, %s29, 0
        %s283 = sadd.s32 %s282, %s280
        %s284 = scalar_lea.vmem %s2, %s283
        %s285 = smul.u32 2, %s30
        %v286 = vld [vmem:[%s235] sm:$0xff]
        %v287 = vld [vmem:[%s235 + $0x8] sm:$0xff]
        %v288 = vld [vmem:[%s244] sm:$0xff]
        %v289 = vld [vmem:[%s244 + $0x8] sm:$0xff]
        %v290 = vld [vmem:[%s284] sm:$0x1]
        %v292 = vlaneseq
        %v293 = vshrl.u32 %v292, 7
        %v294 = vsub.s32 0, %v293
        %v295 = vrot.slane %v290, %v294
        %vm297 = vcmask 130048
        %v299 = vsel %vm297, %v286, 0
        %v302 = vsel %vm297, %v287, 0
        %304 = vmatprep.subr.mxu0 0.0
        %305 = vmatpush1.msra.mxu0 0.0
        %306 = vmatprep.subr.mxu0 0.0
        %307 = vmatpush1.msra.mxu0 0.0
        %308 = vmatprep.subr.mxu0 0.0
        %309 = vmatpush1.msra.mxu0 0.0
        %310 = vmatprep.subr.mxu0 0.0
        %311 = vmatpush1.msra.mxu0 0.0
        %312 = vmatprep.subr.mxu0 0.0
        %313 = vmatpush1.msra.mxu0 0.0
        %314 = vmatprep.subr.mxu0 0.0
        %315 = vmatpush1.msra.mxu0 0.0
        %316 = vmatprep.subr.mxu0 0.0
        %317 = vmatpush1.msra.mxu0 0.0
        %318 = vmatprep.subr.mxu0 0.0
        %319 = vmatpush1.msra.mxu0 0.0
        %320 = vmatprep.subr.mxu0 0.0
        %321 = vmatpush1.msra.mxu0 0.0
        %322 = vmatprep.subr.mxu0 0.0
        %323 = vmatpush1.msra.mxu0 0.0
        %324 = vmatprep.subr.mxu0 0.0
        %325 = vmatpush1.msra.mxu0 0.0
        %326 = vmatprep.subr.mxu0 0.0
        %327 = vmatpush1.msra.mxu0 0.0
        %328 = vmatprep.subr.mxu0 0.0
        %329 = vmatpush1.msra.mxu0 0.0
        %330 = vmatprep.subr.mxu0 0.0
        %331 = vmatpush1.msra.mxu0 0.0
        %332 = vmatprep.subr.mxu0 0.0
        %333 = vmatpush1.msra.mxu0 %v289
        %334 = vmatprep.subr.mxu0 0.0
        %335 = vmatpush1.msra.mxu0 %v288
        %336 = vmatprep.subr.mxu0 0.0
        %337 = vmatpush2.msra.mxu0 0.0
        %338 = vmatprep.subr.mxu0 0.0
        %339 = vmatpush2.msra.mxu0 0.0
        %340 = vmatprep.subr.mxu0 0.0
        %341 = vmatpush2.msra.mxu0 0.0
        %342 = vmatprep.subr.mxu0 0.0
        %343 = vmatpush2.msra.mxu0 0.0
        %344 = vmatprep.subr.mxu0 0.0
        %345 = vmatpush2.msra.mxu0 0.0
        %346 = vmatprep.subr.mxu0 0.0
        %347 = vmatpush2.msra.mxu0 0.0
        %348 = vmatprep.subr.mxu0 0.0
        %349 = vmatpush2.msra.mxu0 0.0
        %350 = vmatprep.subr.mxu0 0.0
        %351 = vmatpush2.msra.mxu0 0.0
        %352 = vmatprep.subr.mxu0 0.0
        %353 = vmatpush2.msra.mxu0 0.0
        %354 = vmatprep.subr.mxu0 0.0
        %355 = vmatpush2.msra.mxu0 0.0
        %356 = vmatprep.subr.mxu0 0.0
        %357 = vmatpush2.msra.mxu0 0.0
        %358 = vmatprep.subr.mxu0 0.0
        %359 = vmatpush2.msra.mxu0 0.0
        %360 = vmatprep.subr.mxu0 0.0
        %361 = vmatpush2.msra.mxu0 0.0
        %362 = vmatprep.subr.mxu0 0.0
        %363 = vmatpush2.msra.mxu0 0.0
        %364 = vmatprep.subr.mxu0 0.0
        %365 = vmatpush2.msra.mxu0 0.0
        %366 = vmatprep.subr.mxu0 0.0
        %367 = vmatpush2.msra.mxu0 0.0
        %368 = vmatprep.mubr.f32.mxu0 0.0
        %369 = vmatmul.mubr.f32.gmra.mxu0 %v299
        %v370 = vpop.f32.mrf.mxu0
        %v371 = vadd.f32 %v295, %v370
        %v372 = vpop.f32.mrf.mxu0
        %373 = vmatprep.mubr.f32.mxu0 0.0
        %374 = vmatmul.mubr.f32.gmra.mxu0 %v302
        %v375 = vpop.f32.mrf.mxu0
        %v376 = vadd.f32 %v295, %v375
        %v377 = vpop.f32.mrf.mxu0
        %378 = vdwg.mxu0
        %379 = vst.msk [vmem:[%s277] sm:$0xff] %vm297, %v371
        %380 = vst.msk [vmem:[%s277 + $0x8] sm:$0xff] %vm297, %v376
        %s381 = sand.u32 %s138, 1
        %s382 = scalar_lea.sflag [#allocation4], %s381
        %s383 = sand.u32 %s138, 1
        %s384 = smul.addr %s383, 16
        %s385 = scalar_lea.vmem [#allocation7], %s384
        // Predicated region
        $region41: #{tpu_custom_call.1} parent=31 // pred_check
          %p386 = pneg %p148
        $region42: #{tpu_custom_call.1} parent=31 // pred_check_branch
          %388 = sbr.rel (%p386) target = $region44
        $region43: #{tpu_custom_call.1} parent=31 // pred_region
          %s389 = smul.u32 2, %s30
          %s391 = ssub.s32 256, 256
          %392 = vsyncadd %s382, %s391
          %s393 = sadd.s32 %s29, %s389
          %s394 = smul.addr %s28, 2
          %s395 = sadd.s32 %s393, %s394
          %s396 = smul.addr %s395, 128
          %s397 = scalar_lea.hbm %s3, %s396
          %s398 = sshll.u32 %s385, 4
          %s399 = int_to_ptr.vmem [resolvable:$true] %s398
          %404 = dma.vmem_to_hbm [thread:$0]  %s399, 256, %s397, %s382, 128, 128, 8
        $region44: #{tpu_custom_call.1} parent=31 // pred_fallthru
          _
      $region32: #{tpu_custom_call.1} parent=5 // pred_fallthru
        _
      %p405 = scmp.le.s32.totalorder 2, %s18
      // Predicated region
      $region45: #{tpu_custom_call.1} parent=5 // pred_check
        %p406 = pneg %p405
      $region46: #{tpu_custom_call.1} parent=5 // pred_check_branch
        %408 = sbr.rel (%p406) target = $region48
      $region47: #{tpu_custom_call.1} parent=5 // pred_region
        %s409 = ssub.s32 %s18, 2
        // Predicated region
        $region49: #{tpu_custom_call.1} parent=47 // pred_check
          %p410 = pneg %p154
        $region50: #{tpu_custom_call.1} parent=47 // pred_check_branch
          %412 = sbr.rel (%p410) target = $region52
        $region51: #{tpu_custom_call.1} parent=47 // pred_region
          %s413 = sand.u32 %s139, 1
          %s414 = scalar_lea.sflag [#allocation4], %s413
          %s415 = sand.u32 %s139, 1
          %s416 = smul.addr %s415, 16
          %s417 = scalar_lea.vmem [#allocation7], %s416
          %418 = dma.done %s414, 256
        $region52: #{tpu_custom_call.1} parent=47 // pred_fallthru
          _
      $region48: #{tpu_custom_call.1} parent=5 // pred_fallthru
        _
    $region6: #{tpu_custom_call.1} parent=1 // loop_footer
      %s22 = sadd.s32 1, %s18
    $region7: #{tpu_custom_call.1} parent=1 // loop_footer_branch
      %17 = sbr.rel target = $region3
    $region8: #{tpu_custom_call.1} parent=1 // loop_exit
      _
    %419 = vsyncpa [#allocation3], 1
    %s420 = scalar_lea.sflag [#allocation3], 1
    %421 = vsyncpa %s420, 1
    %422 = vsyncpa [#allocation6], 1
    %s423 = scalar_lea.sflag [#allocation6], 1
    %424 = vsyncpa %s423, 1
    %425 = vsyncpa [#allocation4], 1
    %s426 = scalar_lea.sflag [#allocation4], 1
    %427 = vsyncpa %s426, 1

</llo_original>
